<compile_context>
chip_gen: v7x
topology: tpu7x:2x2x1
jax: 0.10.0
libtpu: 0.0.40
codegen_flags: <defaults>
</compile_context>

<pallas_src>
import jax
import jax.numpy as jnp
from jax.experimental import pallas as pl
from jax.experimental.pallas import tpu as pltpu


# ----------------------------------------------------------------------------
# small helpers
# ----------------------------------------------------------------------------

def _round_up(x, m):
    return ((x + m - 1) // m) * m


def _pick_tile(dim, preferred, quantum):
    """Largest tile <= preferred that divides `dim` and is a multiple of
    `quantum`; falls back to the full dim (always a legal block size)."""
    if dim <= preferred:
        return dim
    t = (preferred // quantum) * quantum
    while t >= quantum:
        if dim % t == 0:
            return t
        t -= quantum
    return dim


# ----------------------------------------------------------------------------
# Pallas kernels
# ----------------------------------------------------------------------------

def _linear_kernel(x_ref, wt_ref, b_ref, o_ref):
    """o = x @ W + b  (W already (in, out), b (1, out)); f32 accumulation."""
    o_ref[...] = (jnp.dot(x_ref[...], wt_ref[...],
                          preferred_element_type=jnp.float32)
                  + b_ref[...]).astype(o_ref.dtype)


def _gru_scan_kernel(gx_ref, len_ref, h0_ref, whh_ref, bhh_ref,
                     out_ref, hT_ref, h_scratch):
    """One grid step == one timestep of a length-masked GRU.

    gx_ref : (1, Bp, 3Hp)  precomputed x_t @ W_ih + b_ih, gate order [r|z|n]
    len_ref: (Bp, 1) i32   valid lengths (pad rows have length 0)
    h0_ref : (Bp, Hp)      initial hidden
    whh_ref: (Hp, 3Hp)     fused recurrent weight
    bhh_ref: (1, 3Hp)      fused recurrent bias
    out_ref: (1, Bp, Hp)   per-step hidden, zeroed past lengths (pad_packed)
    hT_ref : (Bp, Hp)      hidden at last valid step (packed-sequence hidden)
    """
    t = pl.program_id(0)
    Hp = hT_ref.shape[-1]

    @pl.when(t == 0)
    def _():
        h_scratch[...] = h0_ref[...]

    gx = gx_ref[0]                                              # (Bp, 3Hp)
    h = h_scratch[...]                                          # (Bp, Hp)
    # Single fused recurrent matmul on the serial path.
    gh = (jnp.dot(h, whh_ref[...], preferred_element_type=jnp.float32)
          + bhh_ref[...])                                       # (Bp, 3Hp)

    r = jax.nn.sigmoid(gx[:, :Hp] + gh[:, :Hp])
    z = jax.nn.sigmoid(gx[:, Hp:2 * Hp] + gh[:, Hp:2 * Hp])
    n = jnp.tanh(gx[:, 2 * Hp:] + r * gh[:, 2 * Hp:])
    h_new = (1.0 - z) * n + z * h

    valid = t < len_ref[...]                                    # (Bp, 1)
    out_ref[0] = jnp.where(valid, h_new, 0.0).astype(out_ref.dtype)
    h_keep = jnp.where(valid, h_new, h)
    h_scratch[...] = h_keep
    hT_ref[...] = h_keep.astype(hT_ref.dtype)


def _lse_kernel(x_ref, wt_ref, b_ref, lse_ref, m_sc, s_sc):
    """Pass 1 of streaming log-softmax: running max / sum-exp over V tiles."""
    j = pl.program_id(1)

    @pl.when(j == 0)
    def _():
        m_sc[...] = jnp.full(m_sc.shape, -jnp.inf, m_sc.dtype)
        s_sc[...] = jnp.zeros(s_sc.shape, s_sc.dtype)

    logits = (jnp.dot(x_ref[...], wt_ref[...],
                      preferred_element_type=jnp.float32) + b_ref[...])
    m_prev = m_sc[...]
    m_new = jnp.maximum(m_prev, jnp.max(logits, axis=-1, keepdims=True))
    s_sc[...] = (s_sc[...] * jnp.exp(m_prev - m_new)
                 + jnp.sum(jnp.exp(logits - m_new), axis=-1, keepdims=True))
    m_sc[...] = m_new

    @pl.when(j == pl.num_programs(1) - 1)
    def _():
        lse_ref[...] = m_sc[...] + jnp.log(s_sc[...])


def _logp_kernel(x_ref, wt_ref, b_ref, lse_ref, o_ref):
    """Pass 2: logp tile = logits tile - lse."""
    logits = (jnp.dot(x_ref[...], wt_ref[...],
                      preferred_element_type=jnp.float32) + b_ref[...])
    o_ref[...] = (logits - lse_ref[...]).astype(o_ref.dtype)


# ----------------------------------------------------------------------------
# Wrappers
# ----------------------------------------------------------------------------

def linear(x, wt, b, *, use_bf16=False, row_tile=256):
    """x: (N, K); wt: (K, M) pre-transposed; b: (1, M). Returns f32 (N, M)."""
    N, K = x.shape
    M = wt.shape[1]
    mm_dtype = jnp.bfloat16 if use_bf16 else jnp.float32
    quantum = 16 if use_bf16 else 8
    tn = _pick_tile(N, row_tile, quantum)
    return pl.pallas_call(
        _linear_kernel,
        out_shape=jax.ShapeDtypeStruct((N, M), jnp.float32),
        grid=(N // tn,),
        in_specs=[pl.BlockSpec((tn, K), lambda i: (i, 0)),
                  pl.BlockSpec((K, M), lambda i: (0, 0)),
                  pl.BlockSpec((1, M), lambda i: (0, 0))],
        out_specs=pl.BlockSpec((tn, M), lambda i: (i, 0)),
        compiler_params=pltpu.CompilerParams(
            dimension_semantics=("parallel",)),
    )(x.astype(mm_dtype), wt.astype(mm_dtype), b.astype(jnp.float32))


def gru_scan(x_bte, lengths, h0_p, wih_f, bih_f, whh_f, bhh_f,
             *, use_bf16_input_proj=True):
    """Length-masked GRU (packed-sequence semantics), time-pipelined.

    x_bte: (B, T, E); lengths: (B,); h0_p: (Bp, Hp) padded initial hidden.
    Fused/padded weights: wih_f (E, 3Hp), bih_f (1, 3Hp), whh_f (Hp, 3Hp),
    bhh_f (1, 3Hp).  Returns outputs (B, T, Hp) (zeros past lengths, zeros in
    padded H columns) and final hidden (B, Hp).
    """
    B, T, E = x_bte.shape
    Bp, Hp = h0_p.shape

    # time-major + batch padding (pad rows have length 0 -> stay zero).
    x_tbe = jnp.transpose(x_bte, (1, 0, 2)).astype(jnp.float32)
    x_tbe = jnp.pad(x_tbe, ((0, 0), (0, Bp - B), (0, 0)))
    lens_p = jnp.pad(lengths.astype(jnp.int32), (0, Bp - B)).reshape(Bp, 1)

    # (1) hoisted input projection: one big MXU matmul for all timesteps.
    gx = linear(x_tbe.reshape(T * Bp, E), wih_f, bih_f,
                use_bf16=use_bf16_input_proj)
    gx = gx.reshape(T, Bp, 3 * Hp)

    # (2) serial recurrence, pipelined over time; x/out blocks are DMA'd
    #     per step while the carry lives in a VMEM scratch.
    outs, h_final = pl.pallas_call(
        _gru_scan_kernel,
        out_shape=(jax.ShapeDtypeStruct((T, Bp, Hp), jnp.float32),
                   jax.ShapeDtypeStruct((Bp, Hp), jnp.float32)),
        grid=(T,),
        in_specs=[pl.BlockSpec((1, Bp, 3 * Hp), lambda t: (t, 0, 0)),
                  pl.BlockSpec((Bp, 1), lambda t: (0, 0)),
                  pl.BlockSpec((Bp, Hp), lambda t: (0, 0)),
                  pl.BlockSpec((Hp, 3 * Hp), lambda t: (0, 0)),
                  pl.BlockSpec((1, 3 * Hp), lambda t: (0, 0))],
        out_specs=(pl.BlockSpec((1, Bp, Hp), lambda t: (t, 0, 0)),
                   pl.BlockSpec((Bp, Hp), lambda t: (0, 0))),
        scratch_shapes=[pltpu.VMEM((Bp, Hp), jnp.float32)],
        compiler_params=pltpu.CompilerParams(
            dimension_semantics=("arbitrary",)),
    )(gx, lens_p, h0_p, whh_f, bhh_f)

    outputs = jnp.transpose(outs, (1, 0, 2))[:B]                # (B, T, Hp)
    return outputs, h_final[:B]


def proj_logsoftmax(x, wt, b, *, use_bf16=True, row_tile=256, col_tile=512):
    """log_softmax(x @ wt + b, axis=-1), streamed over the vocab dimension.

    Two passes over V tiles: (1) running max / sum-exp -> lse per row,
    (2) recompute logits tile and subtract lse.  Keeps VMEM bounded even for
    large vocabularies (nothing (N, V)-sized is ever resident).
    """
    N, K = x.shape
    V = wt.shape[1]
    mm_dtype = jnp.bfloat16 if use_bf16 else jnp.float32
    quantum = 16 if use_bf16 else 8
    tn = _pick_tile(N, row_tile, quantum)
    tv = _pick_tile(V, col_tile, 128)
    xq = x.astype(mm_dtype)
    wq = wt.astype(mm_dtype)
    bq = b.astype(jnp.float32)

    lse = pl.pallas_call(
        _lse_kernel,
        out_shape=jax.ShapeDtypeStruct((N, 1), jnp.float32),
        grid=(N // tn, V // tv),
        in_specs=[pl.BlockSpec((tn, K), lambda i, j: (i, 0)),
                  pl.BlockSpec((K, tv), lambda i, j: (0, j)),
                  pl.BlockSpec((1, tv), lambda i, j: (0, j))],
        out_specs=pl.BlockSpec((tn, 1), lambda i, j: (i, 0)),
        scratch_shapes=[pltpu.VMEM((tn, 1), jnp.float32),
                        pltpu.VMEM((tn, 1), jnp.float32)],
        compiler_params=pltpu.CompilerParams(
            dimension_semantics=("parallel", "arbitrary")),
    )(xq, wq, bq)

    logp = pl.pallas_call(
        _logp_kernel,
        out_shape=jax.ShapeDtypeStruct((N, V), jnp.float32),
        grid=(N // tn, V // tv),
        in_specs=[pl.BlockSpec((tn, K), lambda i, j: (i, 0)),
                  pl.BlockSpec((K, tv), lambda i, j: (0, j)),
                  pl.BlockSpec((1, tv), lambda i, j: (0, j)),
                  pl.BlockSpec((tn, 1), lambda i, j: (i, 0))],
        out_specs=pl.BlockSpec((tn, tv), lambda i, j: (i, j)),
        compiler_params=pltpu.CompilerParams(
            dimension_semantics=("parallel", "parallel")),
    )(xq, wq, bq, lse)
    return logp


# ----------------------------------------------------------------------------
# One-time parameter preparation (fuse gates, pad H -> lane width, transpose)
# ----------------------------------------------------------------------------

def prepare_params(raw):
    H = raw['hidden_size']
    L = raw['latent_size']
    V, E = raw['embedding'].shape
    Hp = _round_up(H, 128)

    def fuse_gru(w_ih, w_hh, b_ih, b_hh):
        # PyTorch layout: (3H, E)/(3H, H)/(3H,), gate order [r, z, n].
        wih = jnp.transpose(w_ih.reshape(3, H, E), (0, 2, 1))       # (3, E, H)
        whh = jnp.transpose(w_hh.reshape(3, H, H), (0, 2, 1))       # (3, H, H)
        bih = b_ih.reshape(3, 1, H)
        bhh = b_hh.reshape(3, 1, H)
        wih = jnp.pad(wih, ((0, 0), (0, 0), (0, Hp - H)))           # (3, E, Hp)
        whh = jnp.pad(whh, ((0, 0), (0, Hp - H), (0, Hp - H)))      # (3, Hp, Hp)
        bih = jnp.pad(bih, ((0, 0), (0, 0), (0, Hp - H)))
        bhh = jnp.pad(bhh, ((0, 0), (0, 0), (0, Hp - H)))
        wih_f = jnp.concatenate([wih[0], wih[1], wih[2]], axis=1)   # (E, 3Hp)
        whh_f = jnp.concatenate([whh[0], whh[1], whh[2]], axis=1)   # (Hp, 3Hp)
        bih_f = jnp.concatenate([bih[0], bih[1], bih[2]], axis=1)   # (1, 3Hp)
        bhh_f = jnp.concatenate([bhh[0], bhh[1], bhh[2]], axis=1)
        return (wih_f.astype(jnp.float32), bih_f.astype(jnp.float32),
                whh_f.astype(jnp.float32), bhh_f.astype(jnp.float32))

    enc_wih, enc_bih, enc_whh, enc_bhh = fuse_gru(
        raw['enc_w_ih'], raw['enc_w_hh'], raw['enc_b_ih'], raw['enc_b_hh'])
    dec_wih, dec_bih, dec_whh, dec_bhh = fuse_gru(
        raw['dec_w_ih'], raw['dec_w_hh'], raw['dec_b_ih'], raw['dec_b_hh'])

    pad_rows = lambda wt: jnp.pad(wt, ((0, Hp - H), (0, 0)))  # pad input dim

    return {
        'hidden_size': H, 'latent_size': L, 'Hp': Hp,
        'embedding': raw['embedding'].astype(jnp.float32),
        'enc_wih': enc_wih, 'enc_bih': enc_bih,
        'enc_whh': enc_whh, 'enc_bhh': enc_bhh,
        'dec_wih': dec_wih, 'dec_bih': dec_bih,
        'dec_whh': dec_whh, 'dec_bhh': dec_bhh,
        # hidden2mean / hidden2logv : (H, L), input dim padded to Hp
        'h2mean_wt': pad_rows(raw['h2mean_w'].T.astype(jnp.float32)),
        'h2mean_b': raw['h2mean_b'].reshape(1, L).astype(jnp.float32),
        'h2logv_wt': pad_rows(raw['h2logv_w'].T.astype(jnp.float32)),
        'h2logv_b': raw['h2logv_b'].reshape(1, L).astype(jnp.float32),
        # latent2hidden : (L, H) -> output dim padded to Hp (zeros past H)
        'l2h_wt': jnp.pad(raw['l2h_w'].T.astype(jnp.float32),
                          ((0, 0), (0, Hp - H))),
        'l2h_b': jnp.pad(raw['l2h_b'].reshape(1, H).astype(jnp.float32),
                         ((0, 0), (0, Hp - H))),
        # outputs2vocab : (H, V) -> input dim padded to Hp
        'o2v_wt': pad_rows(raw['o2v_w'].T.astype(jnp.float32)),
        'o2v_b': raw['o2v_b'].reshape(1, V).astype(jnp.float32),
    }


# ----------------------------------------------------------------------------
# SentenceVAE forward (GRU, num_layers=1, unidirectional, word_dropout=0)
# ----------------------------------------------------------------------------

def sentence_vae_forward(prep, input_sequence, trg_sequence,
                         src_length, trg_length, noise_key):
    B = input_sequence.shape[0]
    Hp = prep['Hp']
    L = prep['latent_size']
    V = prep['embedding'].shape[0]
    Bp = _round_up(B, 8)

    # --- sort by source length (descending, like torch.sort(descending=True))
    sorted_idx_src = jnp.argsort(-src_length)
    sorted_src_lengths = src_length[sorted_idx_src]
    inp = input_sequence[sorted_idx_src]
    trg = trg_sequence[sorted_idx_src]

    # --- encoder
    input_embedding = prep['embedding'][inp]                         # (B,Ts,E)
    h0 = jnp.zeros((Bp, Hp), jnp.float32)
    _, hidden = gru_scan(input_embedding, sorted_src_lengths, h0,
                         prep['enc_wih'], prep['enc_bih'],
                         prep['enc_whh'], prep['enc_bhh'])           # (B,Hp)

    # --- reparameterization (mean/logv/z stay in sorted-by-src order, as in
    #     the reference)
    mean = linear(hidden, prep['h2mean_wt'], prep['h2mean_b'])       # (B,L)
    logv = linear(hidden, prep['h2logv_wt'], prep['h2logv_b'])       # (B,L)
    std = jnp.exp(0.5 * logv)
    eps = jax.random.normal(noise_key, (B, L), jnp.float32)          # randn analog
    z = eps * std + mean

    # --- latent -> decoder initial hidden (already lane-padded, zeros past H)
    dec_hidden = linear(z, prep['l2h_wt'], prep['l2h_b'])            # (B,Hp)

    # --- sort by target length
    sorted_idx_trg = jnp.argsort(-trg_length)
    sorted_trg_lengths = trg_length[sorted_idx_trg]
    trg = trg[sorted_idx_trg]
    trg_embedding = prep['embedding'][trg]                           # (B,Tt,E)
    dec_hidden = dec_hidden[sorted_idx_trg]
    dec_h0 = jnp.pad(dec_hidden, ((0, Bp - B), (0, 0)))              # (Bp,Hp)

    # TODO(synk): nn.Dropout(word_dropout) with p>0 in training mode is not
    # reproduced (framework RNG differs); word_dropout=0.0 here -> identity.

    # --- decoder (packed -> length-masked scan, pad_packed -> zeros past len)
    dec_out, _ = gru_scan(trg_embedding, sorted_trg_lengths, dec_h0,
                          prep['dec_wih'], prep['dec_bih'],
                          prep['dec_whh'], prep['dec_bhh'])          # (B,Tt,Hp)

    # --- unsort (exactly mirroring the reference: trg-unsort then src-unsort)
    reversed_idx_trg = jnp.argsort(sorted_idx_trg)
    reversed_idx_src = jnp.argsort(sorted_idx_src)
    padded_outputs = dec_out[reversed_idx_trg][reversed_idx_src]

    b, s, _ = padded_outputs.shape
    logp_flat = proj_logsoftmax(padded_outputs.reshape(b * s, Hp),
                                prep['o2v_wt'], prep['o2v_b'])       # (b*s,V)
    logp = logp_flat.reshape(b, s, V)
    return logp, mean, logv, z


# ----------------------------------------------------------------------------
# Deterministic parameter init (shapes per SentenceVAE.__init__)
# ----------------------------------------------------------------------------

def init_params(key, vocab_size, embedding_size, hidden_size, latent_size):
    ks = jax.random.split(key, 16)
    H, E, L, V = hidden_size, embedding_size, latent_size, vocab_size
    u = lambda k, shape, bound: jax.random.uniform(k, shape, jnp.float32,
                                                   -bound, bound)
    rb = 1.0 / jnp.sqrt(H)
    return {
        'hidden_size': H, 'latent_size': L,
        'embedding': jax.random.normal(ks[0], (V, E), jnp.float32),
        # encoder GRU (weight_ih_l0 (3H,E), weight_hh_l0 (3H,H), biases (3H,))
        'enc_w_ih': u(ks[1], (3 * H, E), rb), 'enc_w_hh': u(ks[2], (3 * H, H), rb),
        'enc_b_ih': u(ks[3], (3 * H,), rb),   'enc_b_hh': u(ks[4], (3 * H,), rb),
        # decoder GRU
        'dec_w_ih': u(ks[5], (3 * H, E), rb), 'dec_w_hh': u(ks[6], (3 * H, H), rb),
        'dec_b_ih': u(ks[7], (3 * H,), rb),   'dec_b_hh': u(ks[8], (3 * H,), rb),
        # hidden2mean / hidden2logv : Linear(H*factor, L)
        'h2mean_w': u(ks[9], (L, H), rb),  'h2mean_b': u(ks[10], (L,), rb),
        'h2logv_w': u(ks[11], (L, H), rb), 'h2logv_b': u(ks[12], (L,), rb),
        # latent2hidden : Linear(L, H*factor)
        'l2h_w': u(ks[13], (H, L), 1.0 / jnp.sqrt(L)),
        'l2h_b': u(ks[14], (H,), 1.0 / jnp.sqrt(L)),
        # outputs2vocab : Linear(H, V)
        'o2v_w': u(ks[15], (V, H), rb),
        'o2v_b': jnp.zeros((V,), jnp.float32),
    }


# ----------------------------------------------------------------------------

if __name__ == "__main__":
    key = jax.random.PRNGKey(0)
    k_param, k_inp, k_trg, k_noise = jax.random.split(key, 4)

    B, T = 2, 8
    embedding_size, hidden_size, latent_size, vocab_size = 16, 32, 16, 32

    raw = init_params(k_param, vocab_size, embedding_size,
                      hidden_size, latent_size)
    prep = prepare_params(raw)     # one-time fuse/pad/transpose of weights

    input_sequence = jax.random.randint(k_inp, (B, T), 0, vocab_size, jnp.int32)
    trg_sequence = jax.random.randint(k_trg, (B, T), 0, vocab_size, jnp.int32)
    src_length = jnp.array([8, 5], dtype=jnp.int32)   # padded to T=8
    trg_length = jnp.array([8, 6], dtype=jnp.int32)   # padded to T=8

    logp, mean, logv, z = sentence_vae_forward(
        prep, input_sequence, trg_sequence, src_length, trg_length, k_noise)

    jax.block_until_ready((logp, mean, logv, z))
    assert logp.shape == (B, T, vocab_size)
    assert mean.shape == (B, latent_size)
    assert logv.shape == (B, latent_size)
    assert z.shape == (B, latent_size)
    assert bool(jnp.all(jnp.isfinite(logp)))
    print("KERNEL_OK")
</pallas_src>

<mosaic_0001>
module attributes {stable_mosaic.version = 11 : i64} {
  func.func @_linear_kernel(%arg0: i32, %arg1: memref<64x16xbf16, #tpu.memory_space<vmem>>, %arg2: memref<16x384xbf16, #tpu.memory_space<vmem>>, %arg3: memref<1x384xf32, #tpu.memory_space<vmem>>, %arg4: memref<64x384xf32, #tpu.memory_space<vmem>>) attributes {dimension_semantics = [#tpu.dimension_semantics<parallel>], iteration_bounds = array<i64: 1>, scalar_prefetch = 0 : i64, scratch_operands = 0 : i64, tpu.core_type = #tpu.core_type<tc>, window_params = [{transform_indices = @transform_0, window_bounds = array<i64: 64, 16>}, {pipeline_mode = #tpu.pipeline_mode<synchronous>, transform_indices = @transform_1, window_bounds = array<i64: 16, 384>}, {pipeline_mode = #tpu.pipeline_mode<synchronous>, transform_indices = @transform_2, window_bounds = array<i64: 1, 384>}, {transform_indices = @transform_3, window_bounds = array<i64: 64, 384>}]} {
    %c0 = arith.constant 0 : index
    %c0_0 = arith.constant 0 : index
    %0 = vector.load %arg1[%c0, %c0_0] : memref<64x16xbf16, #tpu.memory_space<vmem>>, vector<64x16xbf16>
    %c0_1 = arith.constant 0 : index
    %c0_2 = arith.constant 0 : index
    %1 = vector.load %arg2[%c0_1, %c0_2] : memref<16x384xbf16, #tpu.memory_space<vmem>>, vector<16x384xbf16>
    %cst = arith.constant dense<0.000000e+00> : vector<64x384xf32>
    %2 = tpu.matmul %0, %1, %cst {dimension_numbers = #tpu.dot_dimension_numbers<[1], [0], [0], [1], [0, 0, 1, 1], [], []>} : vector<64x16xbf16>, vector<16x384xbf16>, vector<64x384xf32> -> vector<64x384xf32>
    %c0_3 = arith.constant 0 : index
    %c0_4 = arith.constant 0 : index
    %3 = vector.load %arg3[%c0_3, %c0_4] : memref<1x384xf32, #tpu.memory_space<vmem>>, vector<1x384xf32>
    %4 = vector.broadcast %3 : vector<1x384xf32> to vector<64x384xf32>
    %5 = arith.addf %2, %4 : vector<64x384xf32>
    %c0_5 = arith.constant 0 : index
    %c0_6 = arith.constant 0 : index
    %6 = vector.load %arg4[%c0_5, %c0_6] : memref<64x384xf32, #tpu.memory_space<vmem>>, vector<64x384xf32>
    tpu.vector_store %arg4[%c0_5, %c0_6], %5 {strides = array<i32>} : memref<64x384xf32, #tpu.memory_space<vmem>>, vector<64x384xf32>,
    return
  }
  func.func @transform_0(%arg0: i32) -> (i32, i32) {
    %c0_i32 = arith.constant 0 : i32
    %c0_i32_0 = arith.constant 0 : i32
    return %arg0, %c0_i32 : i32, i32
  }
  func.func @transform_1(%arg0: i32) -> (i32, i32) {
    %c0_i32 = arith.constant 0 : i32
    %c0_i32_0 = arith.constant 0 : i32
    %c0_i32_1 = arith.constant 0 : i32
    return %c0_i32, %c0_i32_0 : i32, i32
  }
  func.func @transform_2(%arg0: i32) -> (i32, i32) {
    %c0_i32 = arith.constant 0 : i32
    %c0_i32_0 = arith.constant 0 : i32
    %c0_i32_1 = arith.constant 0 : i32
    return %c0_i32, %c0_i32_0 : i32, i32
  }
  func.func @transform_3(%arg0: i32) -> (i32, i32) {
    %c0_i32 = arith.constant 0 : i32
    %c0_i32_0 = arith.constant 0 : i32
    return %arg0, %c0_i32 : i32, i32
  }
}

</mosaic_0001>

<llo_original>
// kernel: tpu_custom_call.1
$region0: #{tpu_custom_call.1}
  #allocation0 [shape = 'u32[]', space=smem, size = 0x4, offset = 0x4, fixed_abs, tag = 'smem constant byte address 0x4 - core index']
  #allocation1 [shape = 'u32[144,128]{1,0:T(1,128)}', space=vmem, size = 0x12000, scoped, tag = 'internal scratch']
  %s0 = inlined_call_operand.vmem [shape: bf16[64,16], index: 0, kind: input, shape index: {}]
  %s1 = inlined_call_operand.vmem [shape: bf16[16,384], index: 1, kind: input, shape index: {}]
  %s2 = inlined_call_operand.vmem [shape: f32[1,384], index: 2, kind: input, shape index: {}]
  %s3 = inlined_call_operand.hbm [shape: f32[64,384], index: 3, kind: output, shape index: {}]
  %s4 = sld [smem:[#allocation0]]
  $region22: #{tpu_custom_call.1} parent=0
    _
  %s6 = ssub.s32 1, %s4
  %s7 = scalar_select 0, %s6, %s4
  $region1: #{tpu_custom_call.1} parent=0
    #allocation2 [shape = 'u8[98304]{0}', space=vmem, size = 0x18000, scoped, tag = 'output window, operand 0, single buffered']
    #allocation3 [shape = 's32[1]{0}', space=sflag, size = 0x4, scoped, tag = 'scoped memory for tpu_custom_call.1']
    %8 = vsyncpa [#allocation3], 0
    // Predicated region
    $region2: #{tpu_custom_call.1} parent=1 // pred_check
      _
    $region3: #{tpu_custom_call.1} parent=1 // pred_check_branch
      %10 = sbr.rel (0) target = $region5
    $region4: #{tpu_custom_call.1} parent=1 // pred_region
      _
    $region5: #{tpu_custom_call.1} parent=1 // pred_fallthru
      _
    // Predicated region
    $region6: #{tpu_custom_call.1} parent=1 // pred_check
      _
    $region7: #{tpu_custom_call.1} parent=1 // pred_check_branch
      %12 = sbr.rel (0) target = $region9
    $region8: #{tpu_custom_call.1} parent=1 // pred_region
      _
    $region9: #{tpu_custom_call.1} parent=1 // pred_fallthru
      _
    // Predicated region
    $region10: #{tpu_custom_call.1} parent=1 // pred_check
      _
    $region11: #{tpu_custom_call.1} parent=1 // pred_check_branch
      %14 = sbr.rel (0) target = $region13
    $region12: #{tpu_custom_call.1} parent=1 // pred_region
      _
    $region13: #{tpu_custom_call.1} parent=1 // pred_fallthru
      _
    %v16 = vld [vmem:[%s0] sm:$0xf]
    %v17 = vld [vmem:[%s0 + $0x4] sm:$0xf]
    %v18 = vld [vmem:[%s0 + $0x8] sm:$0xf]
    %v19 = vld [vmem:[%s0 + $0xc] sm:$0xf]
    %v20 = vld [vmem:[%s0 + $0x10] sm:$0xf]
    %v21 = vld [vmem:[%s0 + $0x14] sm:$0xf]
    %v22 = vld [vmem:[%s0 + $0x18] sm:$0xf]
    %v23 = vld [vmem:[%s0 + $0x1c] sm:$0xf]
    %v24 = vld [vmem:[%s1] sm:$0xff]
    %v25 = vld [vmem:[%s1 + $0x8] sm:$0xf]
    %v26 = vld [vmem:[%s1 + $0xc] sm:$0xff]
    %v27 = vld [vmem:[%s1 + $0x14] sm:$0xf]
    %v28 = vld [vmem:[%s2] sm:$0x7]
    %v30 = vlaneseq
    %v31 = vshrl.u32 %v30, 7
    %v32 = vsub.s32 0, %v31
    %v33 = vrot.slane %v28, %v32
    %v34 = vlaneseq
    %v35 = vshrl.u32 %v34, 7
    %v36 = vsub.s32 1, %v35
    %v37 = vrot.slane %v28, %v36
    %v38 = vlaneseq
    %v39 = vshrl.u32 %v38, 7
    %v40 = vsub.s32 2, %v39
    %v41 = vrot.slane %v28, %v40
    %v53 = vunpack.c.l.b16 %v16
    %v54 = vunpack.c.l.b16 %v17
    %v55 = vunpack.c.l.b16 %v18
    %v56 = vunpack.c.l.b16 %v19
    %v57 = vunpack.c.l.b16 %v20
    %v58 = vunpack.c.l.b16 %v21
    %v59 = vunpack.c.l.b16 %v22
    %v60 = vunpack.c.l.b16 %v23
    %v61 = vpack.c.b16 %v54, %v53
    %v62 = vpack.c.b16 %v56, %v55
    %v63 = vpack.c.b16 %v58, %v57
    %v64 = vpack.c.b16 %v60, %v59
    %v69 = vunpack.c.l.b16 %v24
    %v70 = vunpack.c.h.b16 %v24
    %v71 = vunpack.c.l.b16 %v25
    %v72 = vunpack.c.l.b16 %v26
    %v73 = vunpack.c.h.b16 %v26
    %v74 = vunpack.c.l.b16 %v27
    %v75 = vpack.c.b16 %v72, %v69
    %v76 = vpack.c.b16 %v73, %v70
    %v77 = vpack.c.b16 %v74, %v71
    %vm81 = vcmask 130048
    %v83 = vsel %vm81, %v61, 0
    %v86 = vsel %vm81, %v62, 0
    %v89 = vsel %vm81, %v63, 0
    %v92 = vsel %vm81, %v64, 0
    %94 = vmatprep.subr.bf16.mxu0 %v76
    %95 = vmatpush1.bf16.msra.mxu0 %v75
    %96 = vmatprep.subr.bf16.mxu0 0
    %97 = vmatpush1.bf16.msra.mxu0 0
    %98 = vmatprep.subr.bf16.mxu0 0
    %99 = vmatpush1.bf16.msra.mxu0 0
    %100 = vmatprep.subr.bf16.mxu0 0
    %101 = vmatpush1.bf16.msra.mxu0 0
    %102 = vmatprep.subr.bf16.mxu0 0
    %103 = vmatpush1.bf16.msra.mxu0 0
    %104 = vmatprep.subr.bf16.mxu0 0
    %105 = vmatpush1.bf16.msra.mxu0 0
    %106 = vmatprep.subr.bf16.mxu0 0
    %107 = vmatpush1.bf16.msra.mxu0 0
    %108 = vmatprep.subr.bf16.mxu0 0
    %109 = vmatpush1.bf16.msra.mxu0 0
    %110 = vmatprep.subr.bf16.mxu0 0
    %111 = vmatpush1.bf16.msra.mxu0 0
    %112 = vmatprep.subr.bf16.mxu0 0
    %113 = vmatpush1.bf16.msra.mxu0 0
    %114 = vmatprep.subr.bf16.mxu0 0
    %115 = vmatpush1.bf16.msra.mxu0 0
    %116 = vmatprep.subr.bf16.mxu0 0
    %117 = vmatpush1.bf16.msra.mxu0 0
    %118 = vmatprep.subr.bf16.mxu0 0
    %119 = vmatpush1.bf16.msra.mxu0 0
    %120 = vmatprep.subr.bf16.mxu0 0
    %121 = vmatpush1.bf16.msra.mxu0 0
    %122 = vmatprep.subr.bf16.mxu0 0
    %123 = vmatpush1.bf16.msra.mxu0 0
    %124 = vmatprep.subr.bf16.mxu0 0
    %125 = vmatpush1.bf16.msra.mxu0 0
    %126 = vmatprep.mubr.bf16.mxu0 0
    %127 = vmatmul.mubr.bf16.gmra.mrb[0].mxu0 %v83
    %v128 = vpop.f32.mrb[0].mxu0
    %v129 = vadd.f32 %v33, %v128
    %v130 = vpop.f32.mrb[0].mxu0
    %v131 = vadd.f32 %v37, %v130
    %v132 = vpop.f32.mrb[0].mxu0
    %v133 = vadd.f32 %v33, %v132
    %v134 = vpop.f32.mrb[0].mxu0
    %v135 = vadd.f32 %v37, %v134
    %136 = vmatprep.mubr.bf16.mxu0 0
    %137 = vmatmul.mubr.bf16.gmra.mrb[0].mxu0 %v86
    %v138 = vpop.f32.mrb[0].mxu0
    %v139 = vadd.f32 %v33, %v138
    %v140 = vpop.f32.mrb[0].mxu0
    %v141 = vadd.f32 %v37, %v140
    %v142 = vpop.f32.mrb[0].mxu0
    %v143 = vadd.f32 %v33, %v142
    %v144 = vpop.f32.mrb[0].mxu0
    %v145 = vadd.f32 %v37, %v144
    %146 = vmatprep.mubr.bf16.mxu0 0
    %147 = vmatmul.mubr.bf16.gmra.mrb[0].mxu0 %v89
    %v148 = vpop.f32.mrb[0].mxu0
    %v149 = vadd.f32 %v33, %v148
    %v150 = vpop.f32.mrb[0].mxu0
    %v151 = vadd.f32 %v37, %v150
    %v152 = vpop.f32.mrb[0].mxu0
    %v153 = vadd.f32 %v33, %v152
    %v154 = vpop.f32.mrb[0].mxu0
    %v155 = vadd.f32 %v37, %v154
    %156 = vmatprep.mubr.bf16.mxu0 0
    %157 = vmatmul.mubr.bf16.gmra.mrb[0].mxu0 %v92
    %v158 = vpop.f32.mrb[0].mxu0
    %v159 = vadd.f32 %v33, %v158
    %v160 = vpop.f32.mrb[0].mxu0
    %v161 = vadd.f32 %v37, %v160
    %v162 = vpop.f32.mrb[0].mxu0
    %v163 = vadd.f32 %v33, %v162
    %v164 = vpop.f32.mrb[0].mxu0
    %v165 = vadd.f32 %v37, %v164
    %166 = vdwg.mxu0
    %167 = vmatprep.subr.bf16.mxu0 0
    %168 = vmatpush1.bf16.msra.mxu0 %v77
    %169 = vmatprep.subr.bf16.mxu0 0
    %170 = vmatpush1.bf16.msra.mxu0 0
    %171 = vmatprep.subr.bf16.mxu0 0
    %172 = vmatpush1.bf16.msra.mxu0 0
    %173 = vmatprep.subr.bf16.mxu0 0
    %174 = vmatpush1.bf16.msra.mxu0 0
    %175 = vmatprep.subr.bf16.mxu0 0
    %176 = vmatpush1.bf16.msra.mxu0 0
    %177 = vmatprep.subr.bf16.mxu0 0
    %178 = vmatpush1.bf16.msra.mxu0 0
    %179 = vmatprep.subr.bf16.mxu0 0
    %180 = vmatpush1.bf16.msra.mxu0 0
    %181 = vmatprep.subr.bf16.mxu0 0
    %182 = vmatpush1.bf16.msra.mxu0 0
    %183 = vmatprep.subr.bf16.mxu0 0
    %184 = vmatpush1.bf16.msra.mxu0 0
    %185 = vmatprep.subr.bf16.mxu0 0
    %186 = vmatpush1.bf16.msra.mxu0 0
    %187 = vmatprep.subr.bf16.mxu0 0
    %188 = vmatpush1.bf16.msra.mxu0 0
    %189 = vmatprep.subr.bf16.mxu0 0
    %190 = vmatpush1.bf16.msra.mxu0 0
    %191 = vmatprep.subr.bf16.mxu0 0
    %192 = vmatpush1.bf16.msra.mxu0 0
    %193 = vmatprep.subr.bf16.mxu0 0
    %194 = vmatpush1.bf16.msra.mxu0 0
    %195 = vmatprep.subr.bf16.mxu0 0
    %196 = vmatpush1.bf16.msra.mxu0 0
    %197 = vmatprep.subr.bf16.mxu0 0
    %198 = vmatpush1.bf16.msra.mxu0 0
    %199 = vmatprep.mubr.bf16.mxu0 0
    %200 = vmatmul.mubr.bf16.gmra.mrb[0].mxu0 %v83
    %v201 = vpop.f32.mrb[0].mxu0
    %v202 = vadd.f32 %v41, %v201
    %v203 = vpop.f32.mrb[0].mxu0
    %v204 = vpop.f32.mrb[0].mxu0
    %v205 = vadd.f32 %v41, %v204
    %v206 = vpop.f32.mrb[0].mxu0
    %207 = vmatprep.mubr.bf16.mxu0 0
    %208 = vmatmul.mubr.bf16.gmra.mrb[0].mxu0 %v86
    %v209 = vpop.f32.mrb[0].mxu0
    %v210 = vadd.f32 %v41, %v209
    %v211 = vpop.f32.mrb[0].mxu0
    %v212 = vpop.f32.mrb[0].mxu0
    %v213 = vadd.f32 %v41, %v212
    %v214 = vpop.f32.mrb[0].mxu0
    %215 = vmatprep.mubr.bf16.mxu0 0
    %216 = vmatmul.mubr.bf16.gmra.mrb[0].mxu0 %v89
    %v217 = vpop.f32.mrb[0].mxu0
    %v218 = vadd.f32 %v41, %v217
    %v219 = vpop.f32.mrb[0].mxu0
    %v220 = vpop.f32.mrb[0].mxu0
    %v221 = vadd.f32 %v41, %v220
    %v222 = vpop.f32.mrb[0].mxu0
    %223 = vmatprep.mubr.bf16.mxu0 0
    %224 = vmatmul.mubr.bf16.gmra.mrb[0].mxu0 %v92
    %v225 = vpop.f32.mrb[0].mxu0
    %v226 = vadd.f32 %v41, %v225
    %v227 = vpop.f32.mrb[0].mxu0
    %v228 = vpop.f32.mrb[0].mxu0
    %v229 = vadd.f32 %v41, %v228
    %v230 = vpop.f32.mrb[0].mxu0
    %231 = vdwg.mxu0
    %232 = vst [vmem:[#allocation2] sm:$0xff] %v129
    %233 = vst [vmem:[#allocation2 + $0x8] sm:$0xff] %v131
    %234 = vst [vmem:[#allocation2 + $0x10] sm:$0xff] %v202
    %235 = vst [vmem:[#allocation2 + $0x18] sm:$0xff] %v133
    %236 = vst [vmem:[#allocation2 + $0x20] sm:$0xff] %v135
    %237 = vst [vmem:[#allocation2 + $0x28] sm:$0xff] %v205
    %238 = vst [vmem:[#allocation2 + $0x30] sm:$0xff] %v139
    %239 = vst [vmem:[#allocation2 + $0x38] sm:$0xff] %v141
    %240 = vst [vmem:[#allocation2 + $0x40] sm:$0xff] %v210
    %241 = vst [vmem:[#allocation2 + $0x48] sm:$0xff] %v143
    %242 = vst [vmem:[#allocation2 + $0x50] sm:$0xff] %v145
    %243 = vst [vmem:[#allocation2 + $0x58] sm:$0xff] %v213
    %244 = vst [vmem:[#allocation2 + $0x60] sm:$0xff] %v149
    %245 = vst [vmem:[#allocation2 + $0x68] sm:$0xff] %v151
    %246 = vst [vmem:[#allocation2 + $0x70] sm:$0xff] %v218
    %247 = vst [vmem:[#allocation2 + $0x78] sm:$0xff] %v153
    %248 = vst [vmem:[#allocation2 + $0x80] sm:$0xff] %v155
    %249 = vst [vmem:[#allocation2 + $0x88] sm:$0xff] %v221
    %250 = vst [vmem:[#allocation2 + $0x90] sm:$0xff] %v159
    %251 = vst [vmem:[#allocation2 + $0x98] sm:$0xff] %v161
    %252 = vst [vmem:[#allocation2 + $0xa0] sm:$0xff] %v226
    %253 = vst [vmem:[#allocation2 + $0xa8] sm:$0xff] %v163
    %254 = vst [vmem:[#allocation2 + $0xb0] sm:$0xff] %v165
    %255 = vst [vmem:[#allocation2 + $0xb8] sm:$0xff] %v229
    // Predicated region
    $region14: #{tpu_custom_call.1} parent=1 // pred_check
      _
    $region15: #{tpu_custom_call.1} parent=1 // pred_check_branch
      %257 = sbr.rel (0) target = $region17
    $region16: #{tpu_custom_call.1} parent=1 // pred_region
      %s259 = ssub.s32 3072, 3072
      %260 = vsyncadd [#allocation3], %s259
      %s261 = sshll.u32 [#allocation2], 4
      %s262 = int_to_ptr.vmem [resolvable:$true] %s261
      %267 = dma.vmem_to_hbm [thread:$0]  %s262, 3072, %s3, [#allocation3], 384, 384, 24
    $region17: #{tpu_custom_call.1} parent=1 // pred_fallthru
      _
    // Predicated region
    $region18: #{tpu_custom_call.1} parent=1 // pred_check
      _
    $region19: #{tpu_custom_call.1} parent=1 // pred_check_branch
      %269 = sbr.rel (0) target = $region21
    $region20: #{tpu_custom_call.1} parent=1 // pred_region
      %270 = dma.done [#allocation3], 3072
    $region21: #{tpu_custom_call.1} parent=1 // pred_fallthru
      _
    %271 = vsyncpa [#allocation3], 1

</llo_original>
